<compile_context>
chip_gen: v7x
topology: tpu7x:2x2x1
jax: 0.10.0
libtpu: 0.0.40
codegen_flags: <defaults>
</compile_context>

<pallas_src>
import functools

import jax
import jax.numpy as jnp
from jax.experimental import pallas as pl
from jax.experimental.pallas import tpu as pltpu

HIDDEN = 128


def critic_kernel(x_ref, w1_ref, w2_ref, b2_ref, w3_ref, b3_ref, out_ref):
    x = x_ref[...]                                            # [tm, K_pad] bf16

    # Layer 1 (b1 is folded into w1 via the ones column appended to x).
    h1 = jnp.dot(x, w1_ref[...], preferred_element_type=jnp.float32)
    h1 = jnp.maximum(h1, 0.0)                                 # [tm, 128] f32

    # Layer 2 (bf16 operands, f32 accumulate / epilogue).
    h2 = jnp.dot(h1.astype(jnp.bfloat16), w2_ref[...],
                 preferred_element_type=jnp.float32)
    h2 = jnp.maximum(h2 + b2_ref[...], 0.0)                   # [tm, 128] f32

    # Layer 3: N=1 output -> VPU multiply + lane (XLU) reduce, then a cheap
    # (tm,1)->(1,tm) transpose so the store is lane-dense.
    col = jnp.sum(h2 * w3_ref[...], axis=-1, keepdims=True)   # [tm, 1]  f32
    row = jnp.transpose(col) + b3_ref[0]                      # [1, tm]  f32
    out_ref[...] = row.astype(out_ref.dtype)


def _round_up(n, m):
    return ((n + m - 1) // m) * m


@functools.partial(jax.jit, static_argnames=("block_batch",))
def critic_forward(state, action, params, *, block_batch=256):
    """state: [B, state_dim], action: [B, action_dim] -> [B, 1] (float32)."""
    w1, b1, w2, b2, w3, b3 = params
    B = state.shape[0]
    K = state.shape[1] + action.shape[1]                      # state+action dim

    # --- wrapper-side layout prep (tiny tensors; free vs. kernel cost) ------
    # Concat state||action, append a ones column (carries b1), pad the feature
    # dim to a sublane multiple (7 -> 8 for CartPole).
    K_aug = K + 1
    K_pad = _round_up(max(K_aug, 8), 8)

    # Batch tile: multiple of 8, capped at block_batch.
    tm = min(block_batch, _round_up(B, 8))
    tm = _round_up(tm, 8)
    B_pad = _round_up(B, tm)
    n_tiles = B_pad // tm

    ones = jnp.ones((B, 1), jnp.float32)
    x = jnp.concatenate(
        [state.astype(jnp.float32), action.astype(jnp.float32), ones], axis=-1)
    x = jnp.pad(x, ((0, B_pad - B), (0, K_pad - K_aug)))      # [B_pad, K_pad]
    x = x.astype(jnp.bfloat16)

    # PyTorch Linear: y = x @ W.T + b, W is [out, in] -> transpose to
    # [in, out]; append b1 as the row matching the ones column; zero-pad.
    w1_aug = jnp.concatenate(
        [w1.T.astype(jnp.float32), b1.astype(jnp.float32).reshape(1, HIDDEN)],
        axis=0)                                               # [K_aug, 128]
    w1_p = jnp.pad(w1_aug, ((0, K_pad - K_aug), (0, 0))).astype(jnp.bfloat16)
    w2_t = w2.T.astype(jnp.bfloat16)                          # [128, 128]
    b2_2d = b2.astype(jnp.float32).reshape(1, HIDDEN)         # [1, 128]  (f32 epilogue)
    w3_row = w3.astype(jnp.float32).reshape(1, HIDDEN)        # [1, 128]  (f32 epilogue)
    b3_1d = b3.astype(jnp.float32).reshape(1)                 # [1]       (SMEM scalar)

    in_specs = [
        pl.BlockSpec((tm, K_pad), lambda i: (i, 0)),          # x (batch-tiled)
        pl.BlockSpec((K_pad, HIDDEN), lambda i: (0, 0)),      # w1 (resident)
        pl.BlockSpec((HIDDEN, HIDDEN), lambda i: (0, 0)),     # w2
        pl.BlockSpec((1, HIDDEN), lambda i: (0, 0)),          # b2
        pl.BlockSpec((1, HIDDEN), lambda i: (0, 0)),          # w3 (as row)
        pl.BlockSpec(memory_space=pltpu.MemorySpace.SMEM),    # b3 (scalar)
    ]
    # Lane-dense output: one (1, tm) row per grid step.
    out_spec = pl.BlockSpec((1, tm), lambda i: (i, 0))

    out_rows = pl.pallas_call(
        critic_kernel,
        out_shape=jax.ShapeDtypeStruct((n_tiles, tm), jnp.float32),
        grid=(n_tiles,),
        in_specs=in_specs,
        out_specs=out_spec,
        compiler_params=pltpu.CompilerParams(
            dimension_semantics=("parallel",),   # shard batch across TCs (v7x)
        ),
    )(x, w1_p, w2_t, b2_2d, w3_row, b3_1d)

    # (n_tiles, tm) row-major == batch order; drop pad rows, restore [B, 1].
    return out_rows.reshape(B_pad, 1)[:B]


def init_params(key, state_dim, action_dim, hidden=HIDDEN):
    """Deterministic PyTorch-style uniform(-1/sqrt(fan_in), 1/sqrt(fan_in)) init."""
    ks = jax.random.split(key, 6)
    in1 = state_dim + action_dim

    def lin(kw, kb, fan_in, fan_out):
        bound = 1.0 / jnp.sqrt(fan_in)
        w = jax.random.uniform(kw, (fan_out, fan_in), jnp.float32, -bound, bound)
        b = jax.random.uniform(kb, (fan_out,), jnp.float32, -bound, bound)
        return w, b

    w1, b1 = lin(ks[0], ks[1], in1, hidden)
    w2, b2 = lin(ks[2], ks[3], hidden, hidden)
    w3, b3 = lin(ks[4], ks[5], hidden, 1)
    return (w1, b1, w2, b2, w3, b3)


if __name__ == "__main__":
    # CartPole-v1: state_dim = 4, action_dim = 2.
    STATE_DIM, ACTION_DIM, BATCH = 4, 2, 8

    key = jax.random.PRNGKey(0)
    k_state, k_action, k_params = jax.random.split(key, 3)

    state = jax.random.normal(k_state, (BATCH, STATE_DIM), jnp.float32)
    action = jax.random.normal(k_action, (BATCH, ACTION_DIM), jnp.float32)
    params = init_params(k_params, STATE_DIM, ACTION_DIM)

    out = critic_forward(state, action, params)
    out = jax.block_until_ready(out)

    # Pure-JAX f32 reference (PyTorch Linear semantics).  Kernel matmuls use
    # bf16 operands with f32 accumulation, so the tolerance is loosened.
    w1, b1, w2, b2, w3, b3 = params
    x = jnp.concatenate([state, action], axis=-1)
    ref = jnp.maximum(x @ w1.T + b1, 0.0)
    ref = jnp.maximum(ref @ w2.T + b2, 0.0)
    ref = ref @ w3.T + b3

    assert out.shape == (BATCH, 1), out.shape
    assert jnp.allclose(out, ref, atol=1e-1, rtol=1e-1), (out, ref)

    print("KERNEL_OK")
</pallas_src>

<mosaic_0001>
module attributes {stable_mosaic.version = 11 : i64} {
  func.func @critic_kernel(%arg0: i32, %arg1: memref<8x8xbf16, #tpu.memory_space<vmem>>, %arg2: memref<8x128xbf16, #tpu.memory_space<vmem>>, %arg3: memref<128x128xbf16, #tpu.memory_space<vmem>>, %arg4: memref<1x128xf32, #tpu.memory_space<vmem>>, %arg5: memref<1x128xf32, #tpu.memory_space<vmem>>, %arg6: memref<1xf32, #tpu.memory_space<smem>>, %arg7: memref<1x8xf32, #tpu.memory_space<vmem>>) attributes {dimension_semantics = [#tpu.dimension_semantics<parallel>], iteration_bounds = array<i64: 1>, scalar_prefetch = 0 : i64, scratch_operands = 0 : i64, tpu.core_type = #tpu.core_type<tc>, window_params = [{transform_indices = @transform_0, window_bounds = array<i64: 8, 8>}, {pipeline_mode = #tpu.pipeline_mode<synchronous>, transform_indices = @transform_1, window_bounds = array<i64: 8, 128>}, {pipeline_mode = #tpu.pipeline_mode<synchronous>, transform_indices = @transform_2, window_bounds = array<i64: 128, 128>}, {pipeline_mode = #tpu.pipeline_mode<synchronous>, transform_indices = @transform_3, window_bounds = array<i64: 1, 128>}, {pipeline_mode = #tpu.pipeline_mode<synchronous>, transform_indices = @transform_4, window_bounds = array<i64: 1, 128>}, {transform_indices = @transform_5, window_bounds = array<i64: 1>}, {transform_indices = @transform_6, window_bounds = array<i64: 1, 8>}]} {
    %c0 = arith.constant 0 : index
    %c0_0 = arith.constant 0 : index
    %0 = vector.load %arg1[%c0, %c0_0] : memref<8x8xbf16, #tpu.memory_space<vmem>>, vector<8x8xbf16>
    %c0_1 = arith.constant 0 : index
    %c0_2 = arith.constant 0 : index
    %1 = vector.load %arg2[%c0_1, %c0_2] : memref<8x128xbf16, #tpu.memory_space<vmem>>, vector<8x128xbf16>
    %cst = arith.constant dense<0.000000e+00> : vector<8x128xf32>
    %2 = tpu.matmul %0, %1, %cst {dimension_numbers = #tpu.dot_dimension_numbers<[1], [0], [0], [1], [0, 0, 1, 1], [], []>} : vector<8x8xbf16>, vector<8x128xbf16>, vector<8x128xf32> -> vector<8x128xf32>
    %cst_3 = arith.constant 0.000000e+00 : f32
    %3 = vector.broadcast %cst_3 : f32 to vector<8x128xf32>
    %4 = arith.maximumf %2, %3 : vector<8x128xf32>
    %5 = arith.truncf %4 : vector<8x128xf32> to vector<8x128xbf16>
    %c0_4 = arith.constant 0 : index
    %c0_5 = arith.constant 0 : index
    %6 = vector.load %arg3[%c0_4, %c0_5] : memref<128x128xbf16, #tpu.memory_space<vmem>>, vector<128x128xbf16>
    %cst_6 = arith.constant dense<0.000000e+00> : vector<8x128xf32>
    %7 = tpu.matmul %5, %6, %cst_6 {dimension_numbers = #tpu.dot_dimension_numbers<[1], [0], [0], [1], [0, 0, 1, 1], [], []>} : vector<8x128xbf16>, vector<128x128xbf16>, vector<8x128xf32> -> vector<8x128xf32>
    %c0_7 = arith.constant 0 : index
    %c0_8 = arith.constant 0 : index
    %8 = vector.load %arg4[%c0_7, %c0_8] : memref<1x128xf32, #tpu.memory_space<vmem>>, vector<1x128xf32>
    %9 = vector.broadcast %8 : vector<1x128xf32> to vector<8x128xf32>
    %10 = arith.addf %7, %9 : vector<8x128xf32>
    %cst_9 = arith.constant 0.000000e+00 : f32
    %11 = vector.broadcast %cst_9 : f32 to vector<8x128xf32>
    %12 = arith.maximumf %10, %11 : vector<8x128xf32>
    %c0_10 = arith.constant 0 : index
    %c0_11 = arith.constant 0 : index
    %13 = vector.load %arg5[%c0_10, %c0_11] : memref<1x128xf32, #tpu.memory_space<vmem>>, vector<1x128xf32>
    %14 = vector.broadcast %13 : vector<1x128xf32> to vector<8x128xf32>
    %15 = arith.mulf %12, %14 : vector<8x128xf32>
    %cst_12 = arith.constant dense<0.000000e+00> : vector<8xf32>
    %16 = vector.multi_reduction <add>, %15, %cst_12 [1] : vector<8x128xf32> to vector<8xf32>
    %17 = vector.shape_cast %16 : vector<8xf32> to vector<8x1xf32>
    %18 = tpu.transpose %17, [1, 0] : vector<8x1xf32> -> vector<1x8xf32>
    %c0_13 = arith.constant 0 : index
    %19 = memref.load %arg6[%c0_13] : memref<1xf32, #tpu.memory_space<smem>>
    %20 = vector.broadcast %19 : f32 to vector<1x8xf32>
    %21 = arith.addf %18, %20 : vector<1x8xf32>
    %c0_14 = arith.constant 0 : index
    %c0_15 = arith.constant 0 : index
    %22 = vector.load %arg7[%c0_14, %c0_15] : memref<1x8xf32, #tpu.memory_space<vmem>>, vector<1x8xf32>
    tpu.vector_store %arg7[%c0_14, %c0_15], %21 {strides = array<i32>} : memref<1x8xf32, #tpu.memory_space<vmem>>, vector<1x8xf32>,
    return
  }
  func.func @transform_0(%arg0: i32) -> (i32, i32) {
    %c0_i32 = arith.constant 0 : i32
    %c0_i32_0 = arith.constant 0 : i32
    return %arg0, %c0_i32 : i32, i32
  }
  func.func @transform_1(%arg0: i32) -> (i32, i32) {
    %c0_i32 = arith.constant 0 : i32
    %c0_i32_0 = arith.constant 0 : i32
    %c0_i32_1 = arith.constant 0 : i32
    return %c0_i32, %c0_i32_0 : i32, i32
  }
  func.func @transform_2(%arg0: i32) -> (i32, i32) {
    %c0_i32 = arith.constant 0 : i32
    %c0_i32_0 = arith.constant 0 : i32
    %c0_i32_1 = arith.constant 0 : i32
    return %c0_i32, %c0_i32_0 : i32, i32
  }
  func.func @transform_3(%arg0: i32) -> (i32, i32) {
    %c0_i32 = arith.constant 0 : i32
    %c0_i32_0 = arith.constant 0 : i32
    %c0_i32_1 = arith.constant 0 : i32
    return %c0_i32, %c0_i32_0 : i32, i32
  }
  func.func @transform_4(%arg0: i32) -> (i32, i32) {
    %c0_i32 = arith.constant 0 : i32
    %c0_i32_0 = arith.constant 0 : i32
    %c0_i32_1 = arith.constant 0 : i32
    return %c0_i32, %c0_i32_0 : i32, i32
  }
  func.func @transform_5(%arg0: i32) -> i32 {
    %c0_i32 = arith.constant 0 : i32
    %c0_i32_0 = arith.constant 0 : i32
    return %c0_i32 : i32
  }
  func.func @transform_6(%arg0: i32) -> (i32, i32) {
    %c0_i32 = arith.constant 0 : i32
    %c0_i32_0 = arith.constant 0 : i32
    return %arg0, %c0_i32 : i32, i32
  }
}

</mosaic_0001>

<llo_original>
// kernel: critic_forward.1
$region0: #{critic_forward.1}
  #allocation0 [shape = 'u32[]', space=smem, size = 0x4, offset = 0x4, fixed_abs, tag = 'smem constant byte address 0x4 - core index']
  #allocation1 [shape = 'u32[144,128]{1,0:T(1,128)}', space=vmem, size = 0x12000, scoped, tag = 'internal scratch']
  #allocation2 [shape = 'f32[1]{0:T(128)S(6)}', space=smem, size = 0x200, scoped, tag = 'scoped memory for critic_forward.1']
  %s0 = inlined_call_operand.vmem [shape: bf16[8,8], index: 0, kind: input, shape index: {}]
  %s1 = inlined_call_operand.vmem [shape: bf16[8,128], index: 1, kind: input, shape index: {}]
  %s2 = inlined_call_operand.vmem [shape: bf16[128,128], index: 2, kind: input, shape index: {}]
  %s3 = inlined_call_operand.vmem [shape: f32[1,128], index: 3, kind: input, shape index: {}]
  %s4 = inlined_call_operand.vmem [shape: f32[1,128], index: 4, kind: input, shape index: {}]
  %s5 = inlined_call_operand.<no memory space> [shape: f32[1], index: 5, kind: input, shape index: {}]
  %s6 = inlined_call_operand.hbm [shape: f32[1,8], index: 6, kind: output, shape index: {}]
  %s7 = sld [smem:[#allocation0]]
  $region34: #{critic_forward.1} parent=0
    _
  %s9 = ssub.s32 1, %s7
  %s10 = scalar_select 0, %s9, %s7
  %11 = sst [smem:[#allocation2]] %s5
  $region1: #{critic_forward.1} parent=0
    #allocation3 [shape = 'u8[512]{0}', space=vmem, size = 0x400, scoped, tag = 'output window, operand 0, single buffered']
    #allocation4 [shape = 's32[1]{0}', space=sflag, size = 0x4, scoped, tag = 'scoped memory for critic_forward.1']
    %12 = vsyncpa [#allocation4], 0
    // Predicated region
    $region2: #{critic_forward.1} parent=1 // pred_check
      _
    $region3: #{critic_forward.1} parent=1 // pred_check_branch
      %14 = sbr.rel (0) target = $region5
    $region4: #{critic_forward.1} parent=1 // pred_region
      _
    $region5: #{critic_forward.1} parent=1 // pred_fallthru
      _
    // Predicated region
    $region6: #{critic_forward.1} parent=1 // pred_check
      _
    $region7: #{critic_forward.1} parent=1 // pred_check_branch
      %16 = sbr.rel (0) target = $region9
    $region8: #{critic_forward.1} parent=1 // pred_region
      _
    $region9: #{critic_forward.1} parent=1 // pred_fallthru
      _
    // Predicated region
    $region10: #{critic_forward.1} parent=1 // pred_check
      _
    $region11: #{critic_forward.1} parent=1 // pred_check_branch
      %18 = sbr.rel (0) target = $region13
    $region12: #{critic_forward.1} parent=1 // pred_region
      _
    $region13: #{critic_forward.1} parent=1 // pred_fallthru
      _
    // Predicated region
    $region14: #{critic_forward.1} parent=1 // pred_check
      _
    $region15: #{critic_forward.1} parent=1 // pred_check_branch
      %20 = sbr.rel (0) target = $region17
    $region16: #{critic_forward.1} parent=1 // pred_region
      _
    $region17: #{critic_forward.1} parent=1 // pred_fallthru
      _
    // Predicated region
    $region18: #{critic_forward.1} parent=1 // pred_check
      _
    $region19: #{critic_forward.1} parent=1 // pred_check_branch
      %22 = sbr.rel (0) target = $region21
    $region20: #{critic_forward.1} parent=1 // pred_region
      _
    $region21: #{critic_forward.1} parent=1 // pred_fallthru
      _
    // Predicated region
    $region22: #{critic_forward.1} parent=1 // pred_check
      _
    $region23: #{critic_forward.1} parent=1 // pred_check_branch
      %24 = sbr.rel (0) target = $region25
    $region24: #{critic_forward.1} parent=1 // pred_region
      _
    $region25: #{critic_forward.1} parent=1 // pred_fallthru
      _
    %v26 = vld [vmem:[%s0] sm:$0xf]
    %v27 = vld [vmem:[%s1] sm:$0xf]
    %vm28 = vcmask 64512
    %v30 = vsel %vm28, %v26, 0
    %vm32 = vcmask 1043456
    %v34 = vsel %vm32, %v27, 0
    %36 = vmatprep.subr.bf16.mxu0 0
    %37 = vmatpush1.bf16.msra.mxu0 %v34
    %38 = vmatprep.subr.bf16.mxu0 0
    %39 = vmatpush1.bf16.msra.mxu0 0
    %40 = vmatprep.subr.bf16.mxu0 0
    %41 = vmatpush1.bf16.msra.mxu0 0
    %42 = vmatprep.subr.bf16.mxu0 0
    %43 = vmatpush1.bf16.msra.mxu0 0
    %44 = vmatprep.subr.bf16.mxu0 0
    %45 = vmatpush1.bf16.msra.mxu0 0
    %46 = vmatprep.subr.bf16.mxu0 0
    %47 = vmatpush1.bf16.msra.mxu0 0
    %48 = vmatprep.subr.bf16.mxu0 0
    %49 = vmatpush1.bf16.msra.mxu0 0
    %50 = vmatprep.subr.bf16.mxu0 0
    %51 = vmatpush1.bf16.msra.mxu0 0
    %52 = vmatprep.subr.bf16.mxu0 0
    %53 = vmatpush1.bf16.msra.mxu0 0
    %54 = vmatprep.subr.bf16.mxu0 0
    %55 = vmatpush1.bf16.msra.mxu0 0
    %56 = vmatprep.subr.bf16.mxu0 0
    %57 = vmatpush1.bf16.msra.mxu0 0
    %58 = vmatprep.subr.bf16.mxu0 0
    %59 = vmatpush1.bf16.msra.mxu0 0
    %60 = vmatprep.subr.bf16.mxu0 0
    %61 = vmatpush1.bf16.msra.mxu0 0
    %62 = vmatprep.subr.bf16.mxu0 0
    %63 = vmatpush1.bf16.msra.mxu0 0
    %64 = vmatprep.subr.bf16.mxu0 0
    %65 = vmatpush1.bf16.msra.mxu0 0
    %66 = vmatprep.subr.bf16.mxu0 0
    %67 = vmatpush1.bf16.msra.mxu0 0
    %68 = vmatprep.mubr.bf16.mxu0 0
    %69 = vmatmul.mubr.bf16.gmra.mrb[0].mxu0 %v30
    %v70 = vpop.f32.mrb[0].mxu0
    %v71 = vadd.f32 0.0, %v70
    %v72 = vpop.f32.mrb[0].mxu0
    %v73 = vpop.f32.mrb[0].mxu0
    %v74 = vpop.f32.mrb[0].mxu0
    %75 = vdwg.mxu0
    %v76 = vmax.f32 %v71, 0.0
    %v77 = vpack.c.bf16 %v76, %v76
    %v78 = vld [vmem:[%s2] sm:$0xf]
    %v79 = vld [vmem:[%s2 + $0x4] sm:$0xf]
    %v80 = vld [vmem:[%s2 + $0x8] sm:$0xf]
    %v81 = vld [vmem:[%s2 + $0xc] sm:$0xf]
    %v82 = vld [vmem:[%s2 + $0x10] sm:$0xf]
    %v83 = vld [vmem:[%s2 + $0x14] sm:$0xf]
    %v84 = vld [vmem:[%s2 + $0x18] sm:$0xf]
    %v85 = vld [vmem:[%s2 + $0x1c] sm:$0xf]
    %v86 = vld [vmem:[%s2 + $0x20] sm:$0xf]
    %v87 = vld [vmem:[%s2 + $0x24] sm:$0xf]
    %v88 = vld [vmem:[%s2 + $0x28] sm:$0xf]
    %v89 = vld [vmem:[%s2 + $0x2c] sm:$0xf]
    %v90 = vld [vmem:[%s2 + $0x30] sm:$0xf]
    %v91 = vld [vmem:[%s2 + $0x34] sm:$0xf]
    %v92 = vld [vmem:[%s2 + $0x38] sm:$0xf]
    %v93 = vld [vmem:[%s2 + $0x3c] sm:$0xf]
    %v94 = vld [vmem:[%s3] sm:$0x1]
    %v96 = vlaneseq
    %v97 = vshrl.u32 %v96, 7
    %v98 = vsub.s32 0, %v97
    %v99 = vrot.slane %v94, %v98
    %v117 = vunpack.c.l.b16 %v78
    %v118 = vunpack.c.l.b16 %v79
    %v119 = vunpack.c.l.b16 %v80
    %v120 = vunpack.c.l.b16 %v81
    %v121 = vunpack.c.l.b16 %v82
    %v122 = vunpack.c.l.b16 %v83
    %v123 = vunpack.c.l.b16 %v84
    %v124 = vunpack.c.l.b16 %v85
    %v125 = vunpack.c.l.b16 %v86
    %v126 = vunpack.c.l.b16 %v87
    %v127 = vunpack.c.l.b16 %v88
    %v128 = vunpack.c.l.b16 %v89
    %v129 = vunpack.c.l.b16 %v90
    %v130 = vunpack.c.l.b16 %v91
    %v131 = vunpack.c.l.b16 %v92
    %v132 = vunpack.c.l.b16 %v93
    %v133 = vpack.c.b16 %v118, %v117
    %v134 = vpack.c.b16 %v120, %v119
    %v135 = vpack.c.b16 %v122, %v121
    %v136 = vpack.c.b16 %v124, %v123
    %v137 = vpack.c.b16 %v126, %v125
    %v138 = vpack.c.b16 %v128, %v127
    %v139 = vpack.c.b16 %v130, %v129
    %v140 = vpack.c.b16 %v132, %v131
    %149 = vmatprep.subr.bf16.mxu0 0
    %150 = vmatpush1.bf16.msra.mxu0 %v133
    %151 = vmatprep.subr.bf16.mxu0 0
    %152 = vmatpush1.bf16.msra.mxu0 %v134
    %153 = vmatprep.subr.bf16.mxu0 0
    %154 = vmatpush1.bf16.msra.mxu0 %v135
    %155 = vmatprep.subr.bf16.mxu0 0
    %156 = vmatpush1.bf16.msra.mxu0 %v136
    %157 = vmatprep.subr.bf16.mxu0 0
    %158 = vmatpush1.bf16.msra.mxu0 %v137
    %159 = vmatprep.subr.bf16.mxu0 0
    %160 = vmatpush1.bf16.msra.mxu0 %v138
    %161 = vmatprep.subr.bf16.mxu0 0
    %162 = vmatpush1.bf16.msra.mxu0 %v139
    %163 = vmatprep.subr.bf16.mxu0 0
    %164 = vmatpush1.bf16.msra.mxu0 %v140
    %165 = vmatprep.subr.bf16.mxu0 0
    %166 = vmatpush1.bf16.msra.mxu0 0
    %167 = vmatprep.subr.bf16.mxu0 0
    %168 = vmatpush1.bf16.msra.mxu0 0
    %169 = vmatprep.subr.bf16.mxu0 0
    %170 = vmatpush1.bf16.msra.mxu0 0
    %171 = vmatprep.subr.bf16.mxu0 0
    %172 = vmatpush1.bf16.msra.mxu0 0
    %173 = vmatprep.subr.bf16.mxu0 0
    %174 = vmatpush1.bf16.msra.mxu0 0
    %175 = vmatprep.subr.bf16.mxu0 0
    %176 = vmatpush1.bf16.msra.mxu0 0
    %177 = vmatprep.subr.bf16.mxu0 0
    %178 = vmatpush1.bf16.msra.mxu0 0
    %179 = vmatprep.subr.bf16.mxu0 0
    %180 = vmatpush1.bf16.msra.mxu0 0
    %181 = vmatprep.mubr.bf16.mxu0 0
    %182 = vmatmul.mubr.bf16.gmra.mrb[0].mxu0 %v77
    %v183 = vpop.f32.mrb[0].mxu0
    %v184 = vadd.f32 %v99, %v183
    %v185 = vpop.f32.mrb[0].mxu0
    %v186 = vpop.f32.mrb[0].mxu0
    %v187 = vpop.f32.mrb[0].mxu0
    %188 = vdwg.mxu0
    %v189 = vmax.f32 %v184, 0.0
    %v190 = vld [vmem:[%s4] sm:$0x1]
    %v192 = vlaneseq
    %v193 = vshrl.u32 %v192, 7
    %v194 = vsub.s32 0, %v193
    %v195 = vrot.slane %v190, %v194
    %v197 = vmul.f32 %v189, %v195
    %198 = vadd.xlane.f32.xlu0 %v197
    %v199 = vpop.xlane.xlu0 %198
    %200 = vxpose.xlu0.b32.start [1/16] %v199, 128
    %201 = vxpose.xlu0.b32.cont [2/16] 0.0, 128
    %202 = vxpose.xlu0.b32.cont [3/16] 0.0, 128
    %203 = vxpose.xlu0.b32.cont [4/16] 0.0, 128
    %204 = vxpose.xlu0.b32.cont [5/16] 0.0, 128
    %205 = vxpose.xlu0.b32.cont [6/16] 0.0, 128
    %206 = vxpose.xlu0.b32.cont [7/16] 0.0, 128
    %207 = vxpose.xlu0.b32.cont [8/16] 0.0, 128
    %208 = vxpose.xlu0.b32.cont [9/16] 0.0, 128
    %209 = vxpose.xlu0.b32.cont [10/16] 0.0, 128
    %210 = vxpose.xlu0.b32.cont [11/16] 0.0, 128
    %211 = vxpose.xlu0.b32.cont [12/16] 0.0, 128
    %212 = vxpose.xlu0.b32.cont [13/16] 0.0, 128
    %213 = vxpose.xlu0.b32.cont [14/16] 0.0, 128
    %214 = vxpose.xlu0.b32.cont [15/16] 0.0, 128
    %215 = vxpose.xlu0.b32.end [16/16] 0.0, 128
    %v216 = vpop.trf.xlu0
    %v217 = vpop.trf.xlu0
    %v218 = vpop.trf.xlu0
    %v219 = vpop.trf.xlu0
    %v220 = vpop.trf.xlu0
    %v221 = vpop.trf.xlu0
    %v222 = vpop.trf.xlu0
    %v223 = vpop.trf.xlu0
    %v224 = vpop.trf.xlu0
    %v225 = vpop.trf.xlu0
    %v226 = vpop.trf.xlu0
    %v227 = vpop.trf.xlu0
    %v228 = vpop.trf.xlu0
    %v229 = vpop.trf.xlu0
    %v230 = vpop.trf.xlu0
    %v231 = vpop.trf.xlu0
    %s232 = sld [smem:[#allocation2]]
    %v233 = vstv %s232
    %v234 = vadd.f32 %v216, %v233
    %vm235 = vcmask 57344
    %236 = vst.msk [vmem:[#allocation3] sm:$0x1] %vm235, %v234
    // Predicated region
    $region26: #{critic_forward.1} parent=1 // pred_check
      _
    $region27: #{critic_forward.1} parent=1 // pred_check_branch
      %238 = sbr.rel (0) target = $region29
    $region28: #{critic_forward.1} parent=1 // pred_region
      %s240 = ssub.s32 16, 16
      %241 = vsyncadd [#allocation4], %s240
      %s243 = sshll.u32 [#allocation3], 4
      %s244 = int_to_ptr.vmem [resolvable:$true] %s243
      %246 = dma.vmem_to_hbm [thread:$0]  %s244, 16, %s6, [#allocation4]
    $region29: #{critic_forward.1} parent=1 // pred_fallthru
      _
    // Predicated region
    $region30: #{critic_forward.1} parent=1 // pred_check
      _
    $region31: #{critic_forward.1} parent=1 // pred_check_branch
      %248 = sbr.rel (0) target = $region33
    $region32: #{critic_forward.1} parent=1 // pred_region
      %249 = dma.done [#allocation4], 16
    $region33: #{critic_forward.1} parent=1 // pred_fallthru
      _
    %250 = vsyncpa [#allocation4], 1

</llo_original>
